<compile_context>
chip_gen: v5e
topology: v5e:2x2
jax: 0.10.0
libtpu: 0.0.40
codegen_flags: <defaults>
</compile_context>

<pallas_src>
import functools

import jax
import jax.numpy as jnp
from jax.experimental import pallas as pl
from jax.experimental.pallas import tpu as pltpu

_LANES = 128


def _xpos_kernel(x_ref, cos_ref, sin_ne_ref, sin_o_ref, o_ref):
    """Elementwise rotary mix on one (TS, D_fold) tile.

    cos_ref    : cos * scale, duplicate-interleaved.
    sin_ne_ref : -sin * scale on even lanes, 0 on odd lanes.
    sin_o_ref  :  sin * scale on odd lanes,  0 on even lanes.

    rotate_every_two(x)[..., 2i]   = -x[..., 2i+1]
    rotate_every_two(x)[..., 2i+1] =  x[..., 2i]
    =>  out = x*cos + x_next*sin_ne + x_prev*sin_o
    where x_next / x_prev are lane shifts by +1 / -1.  The masked tables are zero
    on the lanes where the shift wraps, so the wrap-around never contributes.
    """
    x = x_ref[...]
    x_next = jnp.roll(x, -1, axis=-1)   # [..., j] = x[..., (j+1) % d]
    x_prev = jnp.roll(x, 1, axis=-1)    # [..., j] = x[..., (j-1) % d]
    o_ref[...] = x * cos_ref[...] + x_next * sin_ne_ref[...] + x_prev * sin_o_ref[...]


def _build_tables(length, head_dim, offset, downscale, scale_base, dtype):
    """Replicates XPOS.__init__ buffer + forward's sin/cos/scale construction.

    `offset` may be a traced scalar; all shapes depend only on `length`, so a
    changing decode offset does not trigger recompilation.  Returns three
    (length, head_dim) tables with the rotate_every_two parity/sign folded in.
    """
    half = head_dim // 2
    # register_buffer('scale', ...)
    scale_buf = (jnp.arange(0, head_dim, 2, dtype=jnp.float32) + 0.4 * head_dim) / (1.4 * head_dim)

    offset = jnp.asarray(offset, jnp.int32)
    min_pos = -(length + offset) // 2            # floor division, matches Python semantics
    # After the module's "keep the last `length` rows" slice, row j corresponds to
    # absolute position (offset + j) of the original (length+offset)-row tables.
    pos = offset + jnp.arange(length, dtype=jnp.int32)                # (length,)
    power = (min_pos + pos).astype(jnp.float32) / float(scale_base)   # (length,)
    scale = scale_buf[None, :] ** power[:, None]                      # (length, half)

    # fixed_pos_embedding(scale): seq_len rows, dim = half
    inv_freq = 1.0 / (10000.0 ** (jnp.arange(0, half, dtype=jnp.float32) / half))
    sinusoid = pos.astype(jnp.float32)[:, None] * inv_freq[None, :]   # (length, half)
    sin = jnp.sin(sinusoid)
    cos = jnp.cos(sinusoid)

    if downscale:
        scale = 1.0 / scale

    # duplicate_interleave(t * scale): (length, half) -> (length, head_dim)
    cos_d = jnp.repeat(cos * scale, 2, axis=-1)
    sin_d = jnp.repeat(sin * scale, 2, axis=-1)

    lane = jnp.arange(head_dim, dtype=jnp.int32)
    even = (lane % 2) == 0
    sin_neg_even = jnp.where(even, -sin_d, 0.0)   # used with x[..., j+1] on even lanes
    sin_odd = jnp.where(even, 0.0, sin_d)         # used with x[..., j-1] on odd lanes
    return (cos_d.astype(dtype), sin_neg_even.astype(dtype), sin_odd.astype(dtype))


def _fold_factor(seq_len, head_dim):
    """Fold consecutive seq positions into the lane dim so the last dim reaches 128."""
    if head_dim >= _LANES or _LANES % head_dim != 0:
        return 1
    f = _LANES // head_dim
    while f > 1 and seq_len % f != 0:
        f //= 2
    return max(f, 1)


def _pick_seq_tile(num_rows, lane_width, itemsize):
    """Largest divisor of num_rows giving a ~<=1 MiB block with a legal sublane count."""
    target_rows = max(1, (1 << 20) // max(1, lane_width * itemsize))
    sublane = {4: 8, 2: 16, 1: 32}.get(itemsize, 8)
    for ts in range(min(num_rows, target_rows), 0, -1):
        if num_rows % ts == 0 and (ts % sublane == 0 or ts == num_rows):
            return ts
    return num_rows  # fallback: single full-extent block (always a legal block shape)


@functools.partial(jax.jit, static_argnames=("downscale", "scale_base"))
def xpos_forward(x, offset=0, downscale=False, scale_base=512):
    """Pallas implementation of XPOS(head_dim).forward(x, offset, downscale)."""
    b, s, d = x.shape
    if d % 2 != 0:
        raise ValueError("XPOS requires an even head_dim")

    cos_t, sin_ne_t, sin_o_t = _build_tables(s, d, offset, downscale, scale_base, x.dtype)

    # Lane-dense layout: fold consecutive sequence positions into the lane dim.
    f = _fold_factor(s, d)
    s_f, d_f = s // f, d * f
    x_f = x.reshape(b, s_f, d_f)
    cos_f = cos_t.reshape(s_f, d_f)
    sin_ne_f = sin_ne_t.reshape(s_f, d_f)
    sin_o_f = sin_o_t.reshape(s_f, d_f)

    ts = _pick_seq_tile(s_f, d_f, x.dtype.itemsize)
    grid = (s_f // ts, b)  # seq tiles outer, batch inner -> table blocks stay VMEM-resident

    io_spec = pl.BlockSpec((None, ts, d_f), lambda i, j: (j, i, 0))   # squeezed batch dim
    tbl_spec = pl.BlockSpec((ts, d_f), lambda i, j: (i, 0))

    out_f = pl.pallas_call(
        _xpos_kernel,
        out_shape=jax.ShapeDtypeStruct((b, s_f, d_f), x.dtype),
        grid=grid,
        in_specs=[io_spec, tbl_spec, tbl_spec, tbl_spec],
        out_specs=io_spec,
        compiler_params=pltpu.CompilerParams(
            dimension_semantics=("parallel", "parallel"),
            vmem_limit_bytes=32 * 1024 * 1024,
        ),
    )(x_f, cos_f, sin_ne_f, sin_o_f)
    return out_f.reshape(b, s, d)


def _xpos_reference(x, offset=0, downscale=False, scale_base=512):
    """Pure-JAX reference mirroring the PyTorch module literally (for verification)."""
    length, d = x.shape[1], x.shape[2]
    half = d // 2
    scale_buf = (jnp.arange(0, d, 2, dtype=jnp.float32) + 0.4 * d) / (1.4 * d)
    min_pos = -(length + offset) // 2
    max_pos = length + offset + min_pos
    power = jnp.arange(min_pos, max_pos, dtype=jnp.float32) / scale_base
    scale = scale_buf[None, :] ** power[:, None]
    seq_len = length + offset
    inv_freq = 1.0 / (10000.0 ** (jnp.arange(0, half, dtype=jnp.float32) / half))
    sinusoid = jnp.arange(0, seq_len, dtype=jnp.float32)[:, None] * inv_freq[None, :]
    sin, cos = jnp.sin(sinusoid), jnp.cos(sinusoid)
    if seq_len > length:
        scale, sin, cos = scale[-length:], sin[-length:], cos[-length:]
    if downscale:
        scale = 1.0 / scale
    cos_d = jnp.repeat(cos * scale, 2, axis=-1).astype(x.dtype)
    sin_d = jnp.repeat(sin * scale, 2, axis=-1).astype(x.dtype)
    x1 = x[:, :, ::2]
    x2 = x[:, :, 1::2]
    x_rot = jnp.stack([-x2, x1], axis=-1).reshape(x.shape)
    return x * cos_d + x_rot * sin_d


if __name__ == "__main__":
    key = jax.random.PRNGKey(0)
    cases = [
        ((2, 8, 32), 0, False),    # head_dim < 128 -> lane folding path
        ((2, 32, 64), 3, True),    # offset + downscale path
        ((1, 16, 128), 5, False),  # already lane-dense, no folding
    ]
    for shape, offset, downscale in cases:
        key, sub = jax.random.split(key)
        x = jax.random.normal(sub, shape, dtype=jnp.float32)
        out = jax.block_until_ready(xpos_forward(x, offset=offset, downscale=downscale))
        ref = _xpos_reference(x, offset=offset, downscale=downscale)
        assert out.shape == x.shape and out.dtype == x.dtype
        assert jnp.allclose(out, ref, atol=1e-5, rtol=1e-5), f"Pallas XPOS mismatch for {shape}"
    print("KERNEL_OK")
</pallas_src>

<mosaic_0001>
module attributes {stable_mosaic.version = 11 : i64} {
  func.func @_xpos_kernel(%arg0: i32, %arg1: i32, %arg2: memref<1x2x128xf32, #tpu.memory_space<vmem>>, %arg3: memref<2x128xf32, #tpu.memory_space<vmem>>, %arg4: memref<2x128xf32, #tpu.memory_space<vmem>>, %arg5: memref<2x128xf32, #tpu.memory_space<vmem>>, %arg6: memref<1x2x128xf32, #tpu.memory_space<vmem>>) attributes {dimension_semantics = [#tpu.dimension_semantics<parallel>, #tpu.dimension_semantics<parallel>], iteration_bounds = array<i64: 1, 2>, scalar_prefetch = 0 : i64, scratch_operands = 0 : i64, tpu.core_type = #tpu.core_type<tc>, window_params = [{transform_indices = @transform_0, window_bounds = array<i64: 1, 2, 128>}, {transform_indices = @transform_1, window_bounds = array<i64: 2, 128>}, {transform_indices = @transform_2, window_bounds = array<i64: 2, 128>}, {transform_indices = @transform_3, window_bounds = array<i64: 2, 128>}, {transform_indices = @transform_4, window_bounds = array<i64: 1, 2, 128>}]} {
    %c0 = arith.constant 0 : index
    %c0_0 = arith.constant 0 : index
    %c0_1 = arith.constant 0 : index
    %0 = vector.load %arg2[%c0, %c0_0, %c0_1] : memref<1x2x128xf32, #tpu.memory_space<vmem>>, vector<1x2x128xf32>
    %1 = vector.shape_cast %0 : vector<1x2x128xf32> to vector<2x128xf32>
    %2 = vector.extract_strided_slice %1 {offsets = [0, 1], sizes = [2, 127], strides = [1, 1]} : vector<2x128xf32> to vector<2x127xf32>
    %3 = vector.extract_strided_slice %1 {offsets = [0, 0], sizes = [2, 1], strides = [1, 1]} : vector<2x128xf32> to vector<2x1xf32>
    %4 = tpu.concatenate %2, %3 in 1 : vector<2x127xf32>, vector<2x1xf32> -> vector<2x128xf32>
    %5 = vector.extract_strided_slice %1 {offsets = [0, 127], sizes = [2, 1], strides = [1, 1]} : vector<2x128xf32> to vector<2x1xf32>
    %6 = vector.extract_strided_slice %1 {offsets = [0, 0], sizes = [2, 127], strides = [1, 1]} : vector<2x128xf32> to vector<2x127xf32>
    %7 = tpu.concatenate %5, %6 in 1 : vector<2x1xf32>, vector<2x127xf32> -> vector<2x128xf32>
    %c0_2 = arith.constant 0 : index
    %c0_3 = arith.constant 0 : index
    %8 = vector.load %arg3[%c0_2, %c0_3] : memref<2x128xf32, #tpu.memory_space<vmem>>, vector<2x128xf32>
    %9 = arith.mulf %1, %8 : vector<2x128xf32>
    %c0_4 = arith.constant 0 : index
    %c0_5 = arith.constant 0 : index
    %10 = vector.load %arg4[%c0_4, %c0_5] : memref<2x128xf32, #tpu.memory_space<vmem>>, vector<2x128xf32>
    %11 = arith.mulf %4, %10 : vector<2x128xf32>
    %12 = arith.addf %9, %11 : vector<2x128xf32>
    %c0_6 = arith.constant 0 : index
    %c0_7 = arith.constant 0 : index
    %13 = vector.load %arg5[%c0_6, %c0_7] : memref<2x128xf32, #tpu.memory_space<vmem>>, vector<2x128xf32>
    %14 = arith.mulf %7, %13 : vector<2x128xf32>
    %15 = arith.addf %12, %14 : vector<2x128xf32>
    %c0_8 = arith.constant 0 : index
    %c0_9 = arith.constant 0 : index
    %c0_10 = arith.constant 0 : index
    %16 = vector.load %arg6[%c0_8, %c0_9, %c0_10] : memref<1x2x128xf32, #tpu.memory_space<vmem>>, vector<1x2x128xf32>
    %17 = vector.shape_cast %16 : vector<1x2x128xf32> to vector<2x128xf32>
    %18 = vector.shape_cast %15 : vector<2x128xf32> to vector<1x2x128xf32>
    tpu.vector_store %arg6[%c0_8, %c0_9, %c0_10], %18 {strides = array<i32>} : memref<1x2x128xf32, #tpu.memory_space<vmem>>, vector<1x2x128xf32>,
    return
  }
  func.func @transform_0(%arg0: i32, %arg1: i32) -> (i32, i32, i32) {
    %c0_i32 = arith.constant 0 : i32
    %c0_i32_0 = arith.constant 0 : i32
    return %arg1, %arg0, %c0_i32 : i32, i32, i32
  }
  func.func @transform_1(%arg0: i32, %arg1: i32) -> (i32, i32) {
    %c0_i32 = arith.constant 0 : i32
    %c0_i32_0 = arith.constant 0 : i32
    return %arg0, %c0_i32 : i32, i32
  }
  func.func @transform_2(%arg0: i32, %arg1: i32) -> (i32, i32) {
    %c0_i32 = arith.constant 0 : i32
    %c0_i32_0 = arith.constant 0 : i32
    return %arg0, %c0_i32 : i32, i32
  }
  func.func @transform_3(%arg0: i32, %arg1: i32) -> (i32, i32) {
    %c0_i32 = arith.constant 0 : i32
    %c0_i32_0 = arith.constant 0 : i32
    return %arg0, %c0_i32 : i32, i32
  }
  func.func @transform_4(%arg0: i32, %arg1: i32) -> (i32, i32, i32) {
    %c0_i32 = arith.constant 0 : i32
    %c0_i32_0 = arith.constant 0 : i32
    return %arg1, %arg0, %c0_i32 : i32, i32, i32
  }
}

</mosaic_0001>

<llo_original>
// kernel: xpos_forward.1
$region0: #{xpos_forward.1}
  #allocation0 [shape = 'u32[]', space=smem, size = 0x4, offset = 0x4, fixed_abs, tag = 'smem constant byte address 0x4 - core index']
  #allocation1 [shape = 'u32[72,128]{1,0:T(1,128)}', space=vmem, size = 0x9000, scoped, tag = 'internal scratch']
  %s0 = inlined_call_operand.vmem [shape: f32[2,2,128], index: 0, kind: input, shape index: {}]
  %s1 = inlined_call_operand.vmem [shape: f32[2,128], index: 1, kind: input, shape index: {}]
  %s2 = inlined_call_operand.vmem [shape: f32[2,128], index: 2, kind: input, shape index: {}]
  %s3 = inlined_call_operand.vmem [shape: f32[2,128], index: 3, kind: input, shape index: {}]
  %s4 = inlined_call_operand.vmem [shape: f32[2,2,128], index: 4, kind: output, shape index: {}]
  %s5 = sld [smem:[#allocation0]]
  $region49: #{xpos_forward.1} parent=0
    _
  %s7 = ssub.s32 1, %s5
  %s8 = scalar_select 0, %s7, %s5
  loop: start=0, step=1, limit=4
  $region2: #{xpos_forward.1} parent=0 // loop_pre_header
    _
  $region3: #{xpos_forward.1} parent=0 // loop_header
    %s10 = sphi 0, %s14
    %p11 = scmp.ge.s32.totalorder %s10, 4
    %s17 = sphi 0, %s29
    %s18 = sphi 0, %s25
    %s19 = sphi 0, %s17
    %s20 = sphi 0, %s18
    %s21 = sphi 0, %s19
    %s22 = sphi 0, %s20
    %s34 = sphi 0, %s36
    %s37 = sphi 0, %s34
    %s38 = sphi 0, %s37
    %s54 = sphi 0, %s38
    %s60 = sphi 0, %s62
    %s63 = sphi 0, %s60
    %s64 = sphi 0, %s63
    %s80 = sphi 0, %s64
    %s86 = sphi 0, %s88
    %s89 = sphi 0, %s86
    %s90 = sphi 0, %s89
    %s106 = sphi 0, %s90
    %s112 = sphi 0, %s114
    %s115 = sphi 0, %s112
    %s116 = sphi 0, %s115
    %s132 = sphi 0, %s116
    %s140 = sphi 0, %s142
    %s143 = sphi 0, %s140
    %s144 = sphi 0, %s143
    %s160 = sphi 0, %s144
  $region4: #{xpos_forward.1} parent=0 // loop_header_branch
    %13 = sbr.rel (%p11) target = $region8
  $region5: #{xpos_forward.1} parent=0 // loop_body
    %s15 = ssub.s32 %s10, 1
    %s16 = ssub.s32 %s10, 2
    %s23 = sadd.s32 1, %s18
    %p24 = scmp.ge.s32.totalorder %s23, 2
    %s25 = scalar_select %p24, 0, %s23
    %s26 = sadd.s32 1, %s17
    %s27 = scalar_select %p24, %s26, %s17
    %p28 = scmp.ge.s32.totalorder %s27, 1
    %s29 = scalar_select %p28, 0, %s27
    %s30 = ssub.s32 %s18, %s25
    %s31 = ssub.s32 %s17, %s29
    %s32 = sor.u32 %s30, %s31
    %p33 = scmp.eq.s32.totalorder %s32, 0
    %s35 = sadd.s32 %s34, 1
    %s36 = scalar_select %p33, %s34, %s35
    %p39 = pneg %p33
    %p40 = scmp.eq.s32.totalorder %s10, 1
    %p41 = por %p39, %p40
    %p42 = scmp.ne.s32.totalorder %s34, %s37
    %p43 = scmp.eq.s32.totalorder %s10, 0
    %p44 = por %p42, %p43
    %p45 = scmp.ne.s32.totalorder %s34, %s37
    %p46 = scmp.eq.s32.totalorder %s15, 1
    %p47 = por %p45, %p46
    %p48 = scmp.ne.s32.totalorder %s37, %s38
    %p49 = scmp.eq.s32.totalorder %s15, 0
    %p50 = por %p48, %p49
    %p51 = scmp.ne.s32.totalorder %s37, %s38
    %p52 = scmp.eq.s32.totalorder %s16, 1
    %p53 = por %p51, %p52
    %p55 = scmp.ne.s32.totalorder %s38, %s54
    %p56 = scmp.eq.s32.totalorder %s16, 0
    %p57 = por %p55, %p56
    %s58 = ssub.s32 %s17, %s29
    %p59 = scmp.eq.s32.totalorder %s58, 0
    %s61 = sadd.s32 %s60, 1
    %s62 = scalar_select %p59, %s60, %s61
    %p65 = pneg %p59
    %p66 = scmp.eq.s32.totalorder %s10, 1
    %p67 = por %p65, %p66
    %p68 = scmp.ne.s32.totalorder %s60, %s63
    %p69 = scmp.eq.s32.totalorder %s10, 0
    %p70 = por %p68, %p69
    %p71 = scmp.ne.s32.totalorder %s60, %s63
    %p72 = scmp.eq.s32.totalorder %s15, 1
    %p73 = por %p71, %p72
    %p74 = scmp.ne.s32.totalorder %s63, %s64
    %p75 = scmp.eq.s32.totalorder %s15, 0
    %p76 = por %p74, %p75
    %p77 = scmp.ne.s32.totalorder %s63, %s64
    %p78 = scmp.eq.s32.totalorder %s16, 1
    %p79 = por %p77, %p78
    %p81 = scmp.ne.s32.totalorder %s64, %s80
    %p82 = scmp.eq.s32.totalorder %s16, 0
    %p83 = por %p81, %p82
    %s84 = ssub.s32 %s17, %s29
    %p85 = scmp.eq.s32.totalorder %s84, 0
    %s87 = sadd.s32 %s86, 1
    %s88 = scalar_select %p85, %s86, %s87
    %p91 = pneg %p85
    %p92 = scmp.eq.s32.totalorder %s10, 1
    %p93 = por %p91, %p92
    %p94 = scmp.ne.s32.totalorder %s86, %s89
    %p95 = scmp.eq.s32.totalorder %s10, 0
    %p96 = por %p94, %p95
    %p97 = scmp.ne.s32.totalorder %s86, %s89
    %p98 = scmp.eq.s32.totalorder %s15, 1
    %p99 = por %p97, %p98
    %p100 = scmp.ne.s32.totalorder %s89, %s90
    %p101 = scmp.eq.s32.totalorder %s15, 0
    %p102 = por %p100, %p101
    %p103 = scmp.ne.s32.totalorder %s89, %s90
    %p104 = scmp.eq.s32.totalorder %s16, 1
    %p105 = por %p103, %p104
    %p107 = scmp.ne.s32.totalorder %s90, %s106
    %p108 = scmp.eq.s32.totalorder %s16, 0
    %p109 = por %p107, %p108
    %s110 = ssub.s32 %s17, %s29
    %p111 = scmp.eq.s32.totalorder %s110, 0
    %s113 = sadd.s32 %s112, 1
    %s114 = scalar_select %p111, %s112, %s113
    %p117 = pneg %p111
    %p118 = scmp.eq.s32.totalorder %s10, 1
    %p119 = por %p117, %p118
    %p120 = scmp.ne.s32.totalorder %s112, %s115
    %p121 = scmp.eq.s32.totalorder %s10, 0
    %p122 = por %p120, %p121
    %p123 = scmp.ne.s32.totalorder %s112, %s115
    %p124 = scmp.eq.s32.totalorder %s15, 1
    %p125 = por %p123, %p124
    %p126 = scmp.ne.s32.totalorder %s115, %s116
    %p127 = scmp.eq.s32.totalorder %s15, 0
    %p128 = por %p126, %p127
    %p129 = scmp.ne.s32.totalorder %s115, %s116
    %p130 = scmp.eq.s32.totalorder %s16, 1
    %p131 = por %p129, %p130
    %p133 = scmp.ne.s32.totalorder %s116, %s132
    %p134 = scmp.eq.s32.totalorder %s16, 0
    %p135 = por %p133, %p134
    %s136 = ssub.s32 %s18, %s25
    %s137 = ssub.s32 %s17, %s29
    %s138 = sor.u32 %s136, %s137
    %p139 = scmp.eq.s32.totalorder %s138, 0
    %s141 = sadd.s32 %s140, 1
    %s142 = scalar_select %p139, %s140, %s141
    %p145 = pneg %p139
    %p146 = scmp.eq.s32.totalorder %s10, 1
    %p147 = por %p145, %p146
    %p148 = scmp.ne.s32.totalorder %s140, %s143
    %p149 = scmp.eq.s32.totalorder %s10, 0
    %p150 = por %p148, %p149
    %p151 = scmp.ne.s32.totalorder %s140, %s143
    %p152 = scmp.eq.s32.totalorder %s15, 1
    %p153 = por %p151, %p152
    %p154 = scmp.ne.s32.totalorder %s143, %s144
    %p155 = scmp.eq.s32.totalorder %s15, 0
    %p156 = por %p154, %p155
    %p157 = scmp.ne.s32.totalorder %s143, %s144
    %p158 = scmp.eq.s32.totalorder %s16, 1
    %p159 = por %p157, %p158
    %p161 = scmp.ne.s32.totalorder %s144, %s160
    %p162 = scmp.eq.s32.totalorder %s16, 0
    %p163 = por %p161, %p162
    %p164 = scmp.le.s32.totalorder 1, %s10
    %p165 = scmp.lt.s32.totalorder %s10, 3
    %p166 = pnand %p164, %p165
    %p167 = pneg %p166
    // Predicated region
    $region9: #{xpos_forward.1} parent=5 // pred_check
      _
    $region10: #{xpos_forward.1} parent=5 // pred_check_branch
      %169 = sbr.rel (%p166) target = $region12
    $region11: #{xpos_forward.1} parent=5 // pred_region
      %s170 = ssub.s32 %s10, 1
      // Predicated region
      $region13: #{xpos_forward.1} parent=11 // pred_check
        %p171 = pneg %p76
      $region14: #{xpos_forward.1} parent=11 // pred_check_branch
        %173 = sbr.rel (%p171) target = $region16
      $region15: #{xpos_forward.1} parent=11 // pred_region
        %p174 = scmp.lt.s32.totalorder %s19, 0
        %s175 = scalar_select %p174, %s19, 0
        %s176 = smul.addr %s175, 2
        %s177 = scalar_lea.vmem %s1, %s176
      $region16: #{xpos_forward.1} parent=11 // pred_fallthru
        _
      // Predicated region
      $region17: #{xpos_forward.1} parent=11 // pred_check
        %p178 = pneg %p102
      $region18: #{xpos_forward.1} parent=11 // pred_check_branch
        %180 = sbr.rel (%p178) target = $region20
      $region19: #{xpos_forward.1} parent=11 // pred_region
        %p181 = scmp.lt.s32.totalorder %s19, 0
        %s182 = scalar_select %p181, %s19, 0
        %s183 = smul.addr %s182, 2
        %s184 = scalar_lea.vmem %s2, %s183
      $region20: #{xpos_forward.1} parent=11 // pred_fallthru
        _
      // Predicated region
      $region21: #{xpos_forward.1} parent=11 // pred_check
        %p185 = pneg %p128
      $region22: #{xpos_forward.1} parent=11 // pred_check_branch
        %187 = sbr.rel (%p185) target = $region24
      $region23: #{xpos_forward.1} parent=11 // pred_region
        %p188 = scmp.lt.s32.totalorder %s19, 0
        %s189 = scalar_select %p188, %s19, 0
        %s190 = smul.addr %s189, 2
        %s191 = scalar_lea.vmem %s3, %s190
      $region24: #{xpos_forward.1} parent=11 // pred_fallthru
        _
    $region12: #{xpos_forward.1} parent=5 // pred_fallthru
      _
    %p192 = scmp.lt.s32.totalorder %s10, 2
    // Predicated region
    $region25: #{xpos_forward.1} parent=5 // pred_check
      %p193 = pneg %p192
    $region26: #{xpos_forward.1} parent=5 // pred_check_branch
      %195 = sbr.rel (%p193) target = $region28
    $region27: #{xpos_forward.1} parent=5 // pred_region
      // Predicated region
      $region29: #{xpos_forward.1} parent=27 // pred_check
        %p196 = pneg %p44
      $region30: #{xpos_forward.1} parent=27 // pred_check_branch
        %198 = sbr.rel (%p196) target = $region32
      $region31: #{xpos_forward.1} parent=27 // pred_region
        %p199 = scmp.lt.s32.totalorder %s18, 1
        %s200 = scalar_select %p199, %s18, 1
        %p201 = scmp.lt.s32.totalorder %s17, 0
        %s202 = scalar_select %p201, %s17, 0
        %s203 = sadd.s32 %s202, %s200
        %s204 = smul.addr %s203, 2
        %s205 = scalar_lea.vmem %s0, %s204
      $region32: #{xpos_forward.1} parent=27 // pred_fallthru
        _
    $region28: #{xpos_forward.1} parent=5 // pred_fallthru
      _
    %p206 = scmp.le.s32.totalorder 1, %s10
    %p207 = scmp.lt.s32.totalorder %s10, 3
    %p208 = pnand %p206, %p207
    %p209 = pneg %p208
    // Predicated region
    $region33: #{xpos_forward.1} parent=5 // pred_check
      _
    $region34: #{xpos_forward.1} parent=5 // pred_check_branch
      %211 = sbr.rel (%p208) target = $region36
    $region35: #{xpos_forward.1} parent=5 // pred_region
      %s212 = ssub.s32 %s10, 1
      %p213 = scmp.lt.s32.totalorder %s20, 1
      %s214 = scalar_select %p213, %s20, 1
      %p215 = scmp.lt.s32.totalorder %s19, 0
      %s216 = scalar_select %p215, %s19, 0
      %s217 = sadd.s32 %s216, %s214
      %s218 = smul.addr %s217, 2
      %s219 = scalar_lea.vmem %s0, %s218
      %p220 = pneg %p50
      %p221 = pneg %p47
      %p222 = scmp.lt.s32.totalorder %s19, 0
      %s223 = scalar_select %p222, %s19, 0
      %s224 = smul.addr %s223, 2
      %s225 = scalar_lea.vmem %s1, %s224
      %p226 = pneg %p76
      %p227 = pneg %p73
      %p228 = scmp.lt.s32.totalorder %s19, 0
      %s229 = scalar_select %p228, %s19, 0
      %s230 = smul.addr %s229, 2
      %s231 = scalar_lea.vmem %s2, %s230
      %p232 = pneg %p102
      %p233 = pneg %p99
      %p234 = scmp.lt.s32.totalorder %s19, 0
      %s235 = scalar_select %p234, %s19, 0
      %s236 = smul.addr %s235, 2
      %s237 = scalar_lea.vmem %s3, %s236
      %p238 = pneg %p128
      %p239 = pneg %p125
      %p240 = pneg %p156
      %p241 = pneg %p153
      %p242 = scmp.lt.s32.totalorder %s20, 1
      %s243 = scalar_select %p242, %s20, 1
      %p244 = scmp.lt.s32.totalorder %s19, 0
      %s245 = scalar_select %p244, %s19, 0
      %s246 = sadd.s32 %s245, %s243
      %s247 = smul.addr %s246, 2
      %s248 = scalar_lea.vmem %s4, %s247
      %p249 = scmp.lt.s32.totalorder %s20, 1
      %s250 = scalar_select %p249, %s20, 1
      %p251 = scmp.lt.s32.totalorder %s19, 0
      %s252 = scalar_select %p251, %s19, 0
      %s253 = sadd.s32 %s252, %s250
      %s254 = smul.addr %s253, 2
      %s255 = scalar_lea.vmem %s0, %s254
      %p256 = scmp.lt.s32.totalorder %s19, 0
      %s257 = scalar_select %p256, %s19, 0
      %s258 = smul.addr %s257, 2
      %s259 = scalar_lea.vmem %s1, %s258
      %p260 = scmp.lt.s32.totalorder %s19, 0
      %s261 = scalar_select %p260, %s19, 0
      %s262 = smul.addr %s261, 2
      %s263 = scalar_lea.vmem %s2, %s262
      %p264 = scmp.lt.s32.totalorder %s19, 0
      %s265 = scalar_select %p264, %s19, 0
      %s266 = smul.addr %s265, 2
      %s267 = scalar_lea.vmem %s3, %s266
      %p268 = scmp.lt.s32.totalorder %s20, 1
      %s269 = scalar_select %p268, %s20, 1
      %p270 = scmp.lt.s32.totalorder %s19, 0
      %s271 = scalar_select %p270, %s19, 0
      %s272 = sadd.s32 %s271, %s269
      %s273 = smul.addr %s272, 2
      %s274 = scalar_lea.vmem %s4, %s273
      %v275 = vld [vmem:[%s255] sm:$0x3]
      %277 = vrot.lane.b32.xlu0 %v275, 127
      %v278 = vpop.permute.xlu0 %277
      %280 = vrot.lane.b32.xlu0 %v275, 1
      %v281 = vpop.permute.xlu0 %280
      %v283 = vld [vmem:[%s259] sm:$0x3]
      %v284 = vmul.f32 %v275, %v283
      %v285 = vld [vmem:[%s263] sm:$0x3]
      %v286 = vmul.f32 %v278, %v285
      %v287 = vadd.f32 %v284, %v286
      %v288 = vld [vmem:[%s267] sm:$0x3]
      %v289 = vmul.f32 %v281, %v288
      %v290 = vadd.f32 %v287, %v289
      %291 = vst [vmem:[%s274] sm:$0x3] %v290
      %p292 = scmp.lt.s32.totalorder %s20, 1
      %s293 = scalar_select %p292, %s20, 1
      %p294 = scmp.lt.s32.totalorder %s19, 0
      %s295 = scalar_select %p294, %s19, 0
      %s296 = sadd.s32 %s295, %s293
      %s297 = smul.addr %s296, 2
      %s298 = scalar_lea.vmem %s4, %s297
      // Predicated region
      $region37: #{xpos_forward.1} parent=35 // pred_check
        %p299 = pneg %p153
      $region38: #{xpos_forward.1} parent=35 // pred_check_branch
        %301 = sbr.rel (%p299) target = $region40
      $region39: #{xpos_forward.1} parent=35 // pred_region
        _
      $region40: #{xpos_forward.1} parent=35 // pred_fallthru
        _
    $region36: #{xpos_forward.1} parent=5 // pred_fallthru
      _
    %p302 = scmp.le.s32.totalorder 2, %s10
    // Predicated region
    $region41: #{xpos_forward.1} parent=5 // pred_check
      %p303 = pneg %p302
    $region42: #{xpos_forward.1} parent=5 // pred_check_branch
      %305 = sbr.rel (%p303) target = $region44
    $region43: #{xpos_forward.1} parent=5 // pred_region
      %s306 = ssub.s32 %s10, 2
      // Predicated region
      $region45: #{xpos_forward.1} parent=43 // pred_check
        %p307 = pneg %p159
      $region46: #{xpos_forward.1} parent=43 // pred_check_branch
        %309 = sbr.rel (%p307) target = $region48
      $region47: #{xpos_forward.1} parent=43 // pred_region
        %p310 = scmp.lt.s32.totalorder %s22, 1
        %s311 = scalar_select %p310, %s22, 1
        %p312 = scmp.lt.s32.totalorder %s21, 0
        %s313 = scalar_select %p312, %s21, 0
        %s314 = sadd.s32 %s313, %s311
        %s315 = smul.addr %s314, 2
        %s316 = scalar_lea.vmem %s4, %s315
      $region48: #{xpos_forward.1} parent=43 // pred_fallthru
        _
    $region44: #{xpos_forward.1} parent=5 // pred_fallthru
      _
  $region6: #{xpos_forward.1} parent=0 // loop_footer
    %s14 = sadd.s32 1, %s10
  $region7: #{xpos_forward.1} parent=0 // loop_footer_branch
    %9 = sbr.rel target = $region3
  $region8: #{xpos_forward.1} parent=0 // loop_exit
    _

</llo_original>
